<compile_context>
chip_gen: v7x
topology: tpu7x:2x2x1
jax: 0.10.0
libtpu: 0.0.40
codegen_flags: <defaults>
</compile_context>

<pallas_src>
import jax
import jax.numpy as jnp
import numpy as np
from jax.experimental import pallas as pl
from jax.experimental.pallas import tpu as pltpu


_VMEM_LIMIT = 32 * 1024 * 1024    # scoped VMEM limit passed to the compiler
_VMEM_BUDGET = 20 * 1024 * 1024   # what the tile chooser may use (leaves headroom)
_TILE_CAP = 2048                  # max slab rows per grid step (~1 MiB f32 out block)


def _fused_rbf_kernel(x_ref, e_ref, w_ref, b_ref, o_ref):
    # x_ref: (TS, G*(F+1))  packed angles + per-group ones column
    # e_ref: (G*(F+1), G*K) expansion: sqrt(gamma) spread + (-sqrt(gamma)*centers) row
    # w_ref: (G*K, G*Dp)    block-diagonal stacked linear weights (W.T blocks)
    # b_ref: (1,  G*Dp)     summed bias, tiled G times (zero-padded to Dp)
    # o_ref: (TS, G*Dp)     lane-dense output slab
    z = jnp.dot(x_ref[...], e_ref[...],
                preferred_element_type=jnp.float32)        # sqrt(g)*(x - c)
    rbf = jnp.exp(-(z * z))                                # exp(-gamma*(x-c)^2)
    y = jnp.dot(rbf, w_ref[...],
                preferred_element_type=jnp.float32)        # (TS, G*Dp)
    o_ref[...] = (y + b_ref[...]).astype(o_ref.dtype)


def _two_tensorcores():
    """True on chips with 2 TensorCores per chip (v7x)."""
    try:
        kind = (jax.devices()[0].device_kind or "").lower()
    except Exception:
        return False
    return "v7" in kind


def _pick_slab_tile(n_slab, two_tc, gf, gk, gd):
    """Per-generation slab-row tile (power of two, >= 8).

    1-TC chips: single grid step covering the whole padded input when it fits
    the (VMEM-budgeted) cap.  2-TC chips: largest tile keeping >= 2 grid steps
    (caller pads to an even step count)."""
    def vmem_est(t):
        # 2x double-buffered out + 2x in tile + ~3 (TS, G*K) f32 intermediates
        # + resident E/W/b.
        return 4 * (2 * t * gd + 2 * t * gf + 3 * t * gk
                    + gf * gk + gk * gd + 2 * gd)

    cap = _TILE_CAP
    while cap > 8 and vmem_est(cap) > _VMEM_BUDGET:
        cap //= 2
    if two_tc:
        tile = cap
        while tile > 8 and n_slab < 2 * tile:
            tile //= 2
        return tile
    tile = 8
    while tile < cap and tile < n_slab:
        tile *= 2
    return tile


def _fused_rbf_call(x_slab, e, w, b, *, tile_s, out_dtype):
    n_slab, gf = x_slab.shape
    gk, gd = w.shape
    grid = (n_slab // tile_s,)
    return pl.pallas_call(
        _fused_rbf_kernel,
        out_shape=jax.ShapeDtypeStruct((n_slab, gd), out_dtype),
        grid_spec=pltpu.PrefetchScalarGridSpec(
            num_scalar_prefetch=0,
            grid=grid,
            in_specs=[
                pl.BlockSpec((tile_s, gf), lambda i: (i, 0)),  # packed angles
                pl.BlockSpec((gf, gk), lambda i: (0, 0)),      # expansion (grid-invariant)
                pl.BlockSpec((gk, gd), lambda i: (0, 0)),      # weight    (grid-invariant)
                pl.BlockSpec((1, gd), lambda i: (0, 0)),       # bias      (grid-invariant)
            ],
            out_specs=pl.BlockSpec((tile_s, gd), lambda i: (i, 0)),
        ),
        compiler_params=pltpu.CompilerParams(
            dimension_semantics=("parallel",),
            vmem_limit_bytes=_VMEM_LIMIT,
        ),
    )(x_slab, e, w, b)


class BondAngleFloatRBFPallas:
    """JAX/Pallas port of TMolNet BondAngleFloatRBF (fully fused forward)."""

    def __init__(self, bond_angle_float_names, embed_dim, rbf_params=None,
                 key=None, out_dtype=jnp.float32):
        self.bond_angle_float_names = list(bond_angle_float_names)
        self.embed_dim = int(embed_dim)
        self.out_dtype = out_dtype   # set to jnp.bfloat16 to halve output HBM writes
        if rbf_params is None:
            self.rbf_params = {
                'bond_angle': (jnp.arange(0.0, np.pi, 0.1, dtype=jnp.float32), 10.0)}
        else:
            self.rbf_params = rbf_params
        if key is None:
            key = jax.random.PRNGKey(0)

        # Per-feature parameters (kept for the pure-JAX reference).
        self.centers_list = []
        self.gammas = []
        self.weights_t = []   # (K_f, D) == torch linear.weight.T
        self.biases = []
        for name in self.bond_angle_float_names:
            centers, gamma = self.rbf_params[name]
            centers = jnp.asarray(centers, jnp.float32)
            k = int(centers.shape[0])
            key, kw, kb = jax.random.split(key, 3)
            bound = 1.0 / np.sqrt(k)   # nn.Linear-style init: U(-1/sqrt(K), 1/sqrt(K))
            w = jax.random.uniform(kw, (k, self.embed_dim), jnp.float32, -bound, bound)
            b = jax.random.uniform(kb, (self.embed_dim,), jnp.float32, -bound, bound)
            self.centers_list.append(centers)
            self.gammas.append(float(gamma))
            self.weights_t.append(w)
            self.biases.append(b)

        self._build_fused_params()
        self._two_tc = _two_tensorcores()
        self._fwd = jax.jit(self._forward_padded)

    def _build_fused_params(self):
        d = self.embed_dim
        f = len(self.bond_angle_float_names)
        self.num_features = f
        k_sizes = [int(c.shape[0]) for c in self.centers_list]
        k_tot = int(sum(k_sizes))
        offsets = np.cumsum([0] + k_sizes)
        self.k_tot = k_tot

        # Lane-dense output policy: pack G = 128 // D logical rows per slab row
        # when D divides 128; otherwise keep G = 1 and zero-pad D up to the
        # next multiple of 128 so stores stay unmasked.
        if d <= 128 and 128 % d == 0:
            g, d_pad = 128 // d, d
        else:
            g, d_pad = 1, (-(-d // 128)) * 128
        self.group, self.d_pad = g, d_pad

        w_all = np.concatenate(
            [np.asarray(w, np.float32) for w in self.weights_t], axis=0)  # (K_tot, D)
        b_sum = np.zeros((d,), np.float32)
        for b in self.biases:
            b_sum = b_sum + np.asarray(b, np.float32)

        # Expansion matrix E: row gi*(F+1)+fi spreads sqrt(gamma_fi)*x into the
        # feature's K columns of group gi; row gi*(F+1)+F (driven by the ones
        # column) adds -sqrt(gamma_fi)*centers_fi, so x@E = sqrt(gamma)*(x - c).
        e = np.zeros((g * (f + 1), g * k_tot), np.float32)
        for gi in range(g):
            base = gi * k_tot
            for fi in range(f):
                sg = np.float32(np.sqrt(self.gammas[fi]))
                lo, hi = base + offsets[fi], base + offsets[fi + 1]
                e[gi * (f + 1) + fi, lo:hi] = sg
                e[gi * (f + 1) + f, lo:hi] = -sg * np.asarray(
                    self.centers_list[fi], np.float32)

        # Block-diagonal stacked weight / tiled bias (zero columns pad D -> Dp).
        w_slab = np.zeros((g * k_tot, g * d_pad), np.float32)
        b_slab = np.zeros((1, g * d_pad), np.float32)
        for gi in range(g):
            w_slab[gi * k_tot:(gi + 1) * k_tot, gi * d_pad:gi * d_pad + d] = w_all
            b_slab[0, gi * d_pad:gi * d_pad + d] = b_sum

        self.e_slab = jnp.asarray(e)
        self.w_slab = jnp.asarray(w_slab)
        self.b_slab = jnp.asarray(b_slab)

    def _forward_padded(self, x_mat):
        # x_mat: (N, F+1) f32 with trailing ones column.  Shapes are static
        # under jit, so all the tile / padding math below is Python-time.
        n = x_mat.shape[0]
        g, f = self.group, self.num_features
        gf = g * (f + 1)
        gk = g * self.k_tot
        gd = g * self.d_pad

        n_slab = -(-n // g)
        tile_s = _pick_slab_tile(n_slab, self._two_tc, gf, gk, gd)
        # On 2-TC chips pad to an even step count so both cores get equal work.
        step_quantum = 2 * tile_s if self._two_tc else tile_s
        n_slab_pad = (-(-n_slab // step_quantum)) * step_quantum
        n_pad = n_slab_pad * g

        x_pad = jnp.pad(x_mat, ((0, n_pad - n), (0, 0)))     # single prep op
        x_slab = x_pad.reshape(n_slab_pad, gf)               # contiguous -> free
        out_slab = _fused_rbf_call(x_slab, self.e_slab, self.w_slab, self.b_slab,
                                   tile_s=tile_s, out_dtype=self.out_dtype)
        # Contiguous reshape back; padded rows / padded D columns sliced off.
        return out_slab.reshape(n_pad, self.d_pad)[:n, :self.embed_dim]

    def __call__(self, bond_angle_float_features):
        f = self.num_features
        xs = [jnp.asarray(bond_angle_float_features[i], jnp.float32).reshape(-1)
              for i in range(f)]
        ones = jnp.ones_like(xs[0])
        x_mat = jnp.stack(xs + [ones], axis=1)               # (N, F+1)
        return self._fwd(x_mat)

    def reference(self, bond_angle_float_features):
        """Pure-JAX reference (matches the torch module's per-feature loop)."""
        out_embed = 0
        for i in range(self.num_features):
            x = jnp.asarray(bond_angle_float_features[i], jnp.float32).reshape(-1)
            diff = x[:, None] - self.centers_list[i][None, :]
            rbf = jnp.exp(-self.gammas[i] * diff * diff)
            out_embed = out_embed + rbf @ self.weights_t[i] + self.biases[i]
        return out_embed


if __name__ == "__main__":
    key = jax.random.PRNGKey(0)
    embed_dim = 32
    num_angles = 200  # number of bond angles (N)

    # Default single-feature config (matches the torch module defaults).
    model = BondAngleFloatRBFPallas(
        bond_angle_float_names=['bond_angle'],
        embed_dim=embed_dim,
        key=jax.random.PRNGKey(0),
    )
    key, kx = jax.random.split(key)
    angles = jax.random.uniform(kx, (num_angles,), jnp.float32, 0.0, np.pi)
    out = jax.block_until_ready(model([angles]))
    ref = model.reference([angles])
    np.testing.assert_allclose(np.asarray(out), np.asarray(ref),
                               rtol=5e-5, atol=1e-4)
    assert out.shape == (num_angles, embed_dim)

    # Two-feature config to exercise the fused multi-feature path.
    rbf_params = {
        'bond_angle': (jnp.arange(0.0, np.pi, 0.1, dtype=jnp.float32), 10.0),
        'bond_angle_2': (jnp.arange(0.0, 2.0, 0.25, dtype=jnp.float32), 5.0),
    }
    model2 = BondAngleFloatRBFPallas(
        bond_angle_float_names=['bond_angle', 'bond_angle_2'],
        embed_dim=embed_dim,
        rbf_params=rbf_params,
        key=jax.random.PRNGKey(1),
    )
    key, k1, k2 = jax.random.split(key, 3)
    f1 = jax.random.uniform(k1, (num_angles,), jnp.float32, 0.0, np.pi)
    f2 = jax.random.uniform(k2, (num_angles,), jnp.float32, 0.0, 2.0)
    out2 = jax.block_until_ready(model2([f1, f2]))
    ref2 = model2.reference([f1, f2])
    np.testing.assert_allclose(np.asarray(out2), np.asarray(ref2),
                               rtol=5e-5, atol=1e-4)
    assert out2.shape == (num_angles, embed_dim)

    print("KERNEL_OK")
</pallas_src>

<mosaic_0001>
module attributes {stable_mosaic.version = 11 : i64} {
  func.func @_fused_rbf_kernel(%arg0: i32, %arg1: memref<64x8xf32, #tpu.memory_space<vmem>>, %arg2: memref<8x128xf32, #tpu.memory_space<vmem>>, %arg3: memref<128x128xf32, #tpu.memory_space<vmem>>, %arg4: memref<1x128xf32, #tpu.memory_space<vmem>>, %arg5: memref<64x128xf32, #tpu.memory_space<vmem>>) attributes {dimension_semantics = [#tpu.dimension_semantics<parallel>], iteration_bounds = array<i64: 1>, scalar_prefetch = 0 : i64, scratch_operands = 0 : i64, tpu.core_type = #tpu.core_type<tc>, window_params = [{transform_indices = @transform_0, window_bounds = array<i64: 64, 8>}, {pipeline_mode = #tpu.pipeline_mode<synchronous>, transform_indices = @transform_1, window_bounds = array<i64: 8, 128>}, {pipeline_mode = #tpu.pipeline_mode<synchronous>, transform_indices = @transform_2, window_bounds = array<i64: 128, 128>}, {pipeline_mode = #tpu.pipeline_mode<synchronous>, transform_indices = @transform_3, window_bounds = array<i64: 1, 128>}, {transform_indices = @transform_4, window_bounds = array<i64: 64, 128>}]} {
    %c0 = arith.constant 0 : index
    %c0_0 = arith.constant 0 : index
    %0 = vector.load %arg1[%c0, %c0_0] : memref<64x8xf32, #tpu.memory_space<vmem>>, vector<64x8xf32>
    %c0_1 = arith.constant 0 : index
    %c0_2 = arith.constant 0 : index
    %1 = vector.load %arg2[%c0_1, %c0_2] : memref<8x128xf32, #tpu.memory_space<vmem>>, vector<8x128xf32>
    %cst = arith.constant dense<0.000000e+00> : vector<64x128xf32>
    %2 = tpu.matmul %0, %1, %cst {dimension_numbers = #tpu.dot_dimension_numbers<[1], [0], [0], [1], [0, 0, 1, 1], [], []>} : vector<64x8xf32>, vector<8x128xf32>, vector<64x128xf32> -> vector<64x128xf32>
    %3 = arith.mulf %2, %2 : vector<64x128xf32>
    %cst_3 = arith.constant 0.000000e+00 : f32
    %4 = vector.broadcast %cst_3 : f32 to vector<64x128xf32>
    %5 = arith.subf %4, %3 : vector<64x128xf32>
    %6 = math.exp %5 : vector<64x128xf32>
    %c0_4 = arith.constant 0 : index
    %c0_5 = arith.constant 0 : index
    %7 = vector.load %arg3[%c0_4, %c0_5] : memref<128x128xf32, #tpu.memory_space<vmem>>, vector<128x128xf32>
    %cst_6 = arith.constant dense<0.000000e+00> : vector<64x128xf32>
    %8 = tpu.matmul %6, %7, %cst_6 {dimension_numbers = #tpu.dot_dimension_numbers<[1], [0], [0], [1], [0, 0, 1, 1], [], []>} : vector<64x128xf32>, vector<128x128xf32>, vector<64x128xf32> -> vector<64x128xf32>
    %c0_7 = arith.constant 0 : index
    %c0_8 = arith.constant 0 : index
    %9 = vector.load %arg4[%c0_7, %c0_8] : memref<1x128xf32, #tpu.memory_space<vmem>>, vector<1x128xf32>
    %10 = vector.broadcast %9 : vector<1x128xf32> to vector<64x128xf32>
    %11 = arith.addf %8, %10 : vector<64x128xf32>
    %c0_9 = arith.constant 0 : index
    %c0_10 = arith.constant 0 : index
    %12 = vector.load %arg5[%c0_9, %c0_10] : memref<64x128xf32, #tpu.memory_space<vmem>>, vector<64x128xf32>
    tpu.vector_store %arg5[%c0_9, %c0_10], %11 {strides = array<i32>} : memref<64x128xf32, #tpu.memory_space<vmem>>, vector<64x128xf32>,
    return
  }
  func.func @transform_0(%arg0: i32) -> (i32, i32) {
    %c0_i32 = arith.constant 0 : i32
    %c0_i32_0 = arith.constant 0 : i32
    return %arg0, %c0_i32 : i32, i32
  }
  func.func @transform_1(%arg0: i32) -> (i32, i32) {
    %c0_i32 = arith.constant 0 : i32
    %c0_i32_0 = arith.constant 0 : i32
    %c0_i32_1 = arith.constant 0 : i32
    return %c0_i32, %c0_i32_0 : i32, i32
  }
  func.func @transform_2(%arg0: i32) -> (i32, i32) {
    %c0_i32 = arith.constant 0 : i32
    %c0_i32_0 = arith.constant 0 : i32
    %c0_i32_1 = arith.constant 0 : i32
    return %c0_i32, %c0_i32_0 : i32, i32
  }
  func.func @transform_3(%arg0: i32) -> (i32, i32) {
    %c0_i32 = arith.constant 0 : i32
    %c0_i32_0 = arith.constant 0 : i32
    %c0_i32_1 = arith.constant 0 : i32
    return %c0_i32, %c0_i32_0 : i32, i32
  }
  func.func @transform_4(%arg0: i32) -> (i32, i32) {
    %c0_i32 = arith.constant 0 : i32
    %c0_i32_0 = arith.constant 0 : i32
    return %arg0, %c0_i32 : i32, i32
  }
}

</mosaic_0001>

<llo_original>
// kernel: _forward_padded.1
$region0: #{_forward_padded.1}
  #allocation0 [shape = 'u32[]', space=smem, size = 0x4, offset = 0x4, fixed_abs, tag = 'smem constant byte address 0x4 - core index']
  #allocation1 [shape = 'u32[144,128]{1,0:T(1,128)}', space=vmem, size = 0x12000, scoped, tag = 'internal scratch']
  %s0 = inlined_call_operand.vmem [shape: f32[64,8], index: 0, kind: input, shape index: {}]
  %s1 = inlined_call_operand.vmem [shape: f32[8,128], index: 1, kind: input, shape index: {}]
  %s2 = inlined_call_operand.vmem [shape: f32[128,128], index: 2, kind: input, shape index: {}]
  %s3 = inlined_call_operand.vmem [shape: f32[1,128], index: 3, kind: input, shape index: {}]
  %s4 = inlined_call_operand.vmem [shape: f32[64,128], index: 4, kind: output, shape index: {}]
  %s5 = sld [smem:[#allocation0]]
  $region26: #{_forward_padded.1} parent=0
    _
  %s7 = ssub.s32 1, %s5
  %s8 = scalar_select 0, %s7, %s5
  // Predicated region
  $region2: #{_forward_padded.1} parent=0 // pred_check
    _
  $region3: #{_forward_padded.1} parent=0 // pred_check_branch
    %10 = sbr.rel (0) target = $region5
  $region4: #{_forward_padded.1} parent=0 // pred_region
    _
  $region5: #{_forward_padded.1} parent=0 // pred_fallthru
    _
  // Predicated region
  $region6: #{_forward_padded.1} parent=0 // pred_check
    _
  $region7: #{_forward_padded.1} parent=0 // pred_check_branch
    %12 = sbr.rel (0) target = $region9
  $region8: #{_forward_padded.1} parent=0 // pred_region
    _
  $region9: #{_forward_padded.1} parent=0 // pred_fallthru
    _
  // Predicated region
  $region10: #{_forward_padded.1} parent=0 // pred_check
    _
  $region11: #{_forward_padded.1} parent=0 // pred_check_branch
    %14 = sbr.rel (0) target = $region13
  $region12: #{_forward_padded.1} parent=0 // pred_region
    _
  $region13: #{_forward_padded.1} parent=0 // pred_fallthru
    _
  // Predicated region
  $region14: #{_forward_padded.1} parent=0 // pred_check
    _
  $region15: #{_forward_padded.1} parent=0 // pred_check_branch
    %16 = sbr.rel (0) target = $region17
  $region16: #{_forward_padded.1} parent=0 // pred_region
    _
  $region17: #{_forward_padded.1} parent=0 // pred_fallthru
    _
  %v17 = vld [vmem:[%s0] sm:$0xff]
  %v18 = vld [vmem:[%s0 + $0x8] sm:$0xff]
  %v19 = vld [vmem:[%s0 + $0x10] sm:$0xff]
  %v20 = vld [vmem:[%s0 + $0x18] sm:$0xff]
  %v21 = vld [vmem:[%s0 + $0x20] sm:$0xff]
  %v22 = vld [vmem:[%s0 + $0x28] sm:$0xff]
  %v23 = vld [vmem:[%s0 + $0x30] sm:$0xff]
  %v24 = vld [vmem:[%s0 + $0x38] sm:$0xff]
  %v25 = vld [vmem:[%s1] sm:$0xff]
  %vm26 = vcmask 64512
  %v28 = vsel %vm26, %v17, 0
  %v31 = vsel %vm26, %v18, 0
  %v34 = vsel %vm26, %v19, 0
  %v37 = vsel %vm26, %v20, 0
  %v40 = vsel %vm26, %v21, 0
  %v43 = vsel %vm26, %v22, 0
  %v46 = vsel %vm26, %v23, 0
  %v49 = vsel %vm26, %v24, 0
  %51 = vmatprep.subr.mxu0 0.0
  %52 = vmatpush1.msra.mxu0 %v25
  %53 = vmatprep.subr.mxu0 0.0
  %54 = vmatpush1.msra.mxu0 0.0
  %55 = vmatprep.subr.mxu0 0.0
  %56 = vmatpush1.msra.mxu0 0.0
  %57 = vmatprep.subr.mxu0 0.0
  %58 = vmatpush1.msra.mxu0 0.0
  %59 = vmatprep.subr.mxu0 0.0
  %60 = vmatpush1.msra.mxu0 0.0
  %61 = vmatprep.subr.mxu0 0.0
  %62 = vmatpush1.msra.mxu0 0.0
  %63 = vmatprep.subr.mxu0 0.0
  %64 = vmatpush1.msra.mxu0 0.0
  %65 = vmatprep.subr.mxu0 0.0
  %66 = vmatpush1.msra.mxu0 0.0
  %67 = vmatprep.subr.mxu0 0.0
  %68 = vmatpush1.msra.mxu0 0.0
  %69 = vmatprep.subr.mxu0 0.0
  %70 = vmatpush1.msra.mxu0 0.0
  %71 = vmatprep.subr.mxu0 0.0
  %72 = vmatpush1.msra.mxu0 0.0
  %73 = vmatprep.subr.mxu0 0.0
  %74 = vmatpush1.msra.mxu0 0.0
  %75 = vmatprep.subr.mxu0 0.0
  %76 = vmatpush1.msra.mxu0 0.0
  %77 = vmatprep.subr.mxu0 0.0
  %78 = vmatpush1.msra.mxu0 0.0
  %79 = vmatprep.subr.mxu0 0.0
  %80 = vmatpush1.msra.mxu0 0.0
  %81 = vmatprep.subr.mxu0 0.0
  %82 = vmatpush1.msra.mxu0 0.0
  %83 = vmatprep.subr.mxu0 0.0
  %84 = vmatpush1.msra.mxu0 0.0
  %85 = vmatprep.subr.mxu0 0.0
  %86 = vmatpush1.msra.mxu0 0.0
  %87 = vmatprep.subr.mxu0 0.0
  %88 = vmatpush1.msra.mxu0 0.0
  %89 = vmatprep.subr.mxu0 0.0
  %90 = vmatpush1.msra.mxu0 0.0
  %91 = vmatprep.subr.mxu0 0.0
  %92 = vmatpush1.msra.mxu0 0.0
  %93 = vmatprep.subr.mxu0 0.0
  %94 = vmatpush1.msra.mxu0 0.0
  %95 = vmatprep.subr.mxu0 0.0
  %96 = vmatpush1.msra.mxu0 0.0
  %97 = vmatprep.subr.mxu0 0.0
  %98 = vmatpush1.msra.mxu0 0.0
  %99 = vmatprep.subr.mxu0 0.0
  %100 = vmatpush1.msra.mxu0 0.0
  %101 = vmatprep.subr.mxu0 0.0
  %102 = vmatpush1.msra.mxu0 0.0
  %103 = vmatprep.subr.mxu0 0.0
  %104 = vmatpush1.msra.mxu0 0.0
  %105 = vmatprep.subr.mxu0 0.0
  %106 = vmatpush1.msra.mxu0 0.0
  %107 = vmatprep.subr.mxu0 0.0
  %108 = vmatpush1.msra.mxu0 0.0
  %109 = vmatprep.subr.mxu0 0.0
  %110 = vmatpush1.msra.mxu0 0.0
  %111 = vmatprep.subr.mxu0 0.0
  %112 = vmatpush1.msra.mxu0 0.0
  %113 = vmatprep.subr.mxu0 0.0
  %114 = vmatpush1.msra.mxu0 0.0
  %115 = vmatprep.mubr.f32.mxu0 0.0
  %116 = vmatmul.mubr.f32.gmra.mrb[0].mxu0 %v28
  %v117 = vpop.f32.mrb[0].mxu0
  %v118 = vadd.f32 0.0, %v117
  %v119 = vpop.f32.mrb[0].mxu0
  %120 = vmatprep.mubr.f32.mxu0 0.0
  %121 = vmatmul.mubr.f32.gmra.mrb[0].mxu0 %v31
  %v122 = vpop.f32.mrb[0].mxu0
  %v123 = vadd.f32 0.0, %v122
  %v124 = vpop.f32.mrb[0].mxu0
  %125 = vmatprep.mubr.f32.mxu0 0.0
  %126 = vmatmul.mubr.f32.gmra.mrb[0].mxu0 %v34
  %v127 = vpop.f32.mrb[0].mxu0
  %v128 = vadd.f32 0.0, %v127
  %v129 = vpop.f32.mrb[0].mxu0
  %130 = vmatprep.mubr.f32.mxu0 0.0
  %131 = vmatmul.mubr.f32.gmra.mrb[0].mxu0 %v37
  %v132 = vpop.f32.mrb[0].mxu0
  %v133 = vadd.f32 0.0, %v132
  %v134 = vpop.f32.mrb[0].mxu0
  %135 = vmatprep.mubr.f32.mxu0 0.0
  %136 = vmatmul.mubr.f32.gmra.mrb[0].mxu0 %v40
  %v137 = vpop.f32.mrb[0].mxu0
  %v138 = vadd.f32 0.0, %v137
  %v139 = vpop.f32.mrb[0].mxu0
  %140 = vmatprep.mubr.f32.mxu0 0.0
  %141 = vmatmul.mubr.f32.gmra.mrb[0].mxu0 %v43
  %v142 = vpop.f32.mrb[0].mxu0
  %v143 = vadd.f32 0.0, %v142
  %v144 = vpop.f32.mrb[0].mxu0
  %145 = vmatprep.mubr.f32.mxu0 0.0
  %146 = vmatmul.mubr.f32.gmra.mrb[0].mxu0 %v46
  %v147 = vpop.f32.mrb[0].mxu0
  %v148 = vadd.f32 0.0, %v147
  %v149 = vpop.f32.mrb[0].mxu0
  %150 = vmatprep.mubr.f32.mxu0 0.0
  %151 = vmatmul.mubr.f32.gmra.mrb[0].mxu0 %v49
  %v152 = vpop.f32.mrb[0].mxu0
  %v153 = vadd.f32 0.0, %v152
  %v154 = vpop.f32.mrb[0].mxu0
  %155 = vdwg.mxu0
  %v156 = vmul.f32 %v118, %v118
  %v157 = vmul.f32 %v123, %v123
  %v158 = vmul.f32 %v128, %v128
  %v159 = vmul.f32 %v133, %v133
  %v160 = vmul.f32 %v138, %v138
  %v161 = vmul.f32 %v143, %v143
  %v162 = vmul.f32 %v148, %v148
  %v163 = vmul.f32 %v153, %v153
  %v164 = vsub.f32 0.0, %v156
  %v165 = vsub.f32 0.0, %v157
  %v166 = vsub.f32 0.0, %v158
  %v167 = vsub.f32 0.0, %v159
  %v168 = vsub.f32 0.0, %v160
  %v169 = vsub.f32 0.0, %v161
  %v170 = vsub.f32 0.0, %v162
  %v171 = vsub.f32 0.0, %v163
  %v172 = vmul.f32 %v164, 1.442695
  %v173 = vpow.pop %v172
  %v174 = vmul.f32 %v165, 1.442695
  %v175 = vpow.pop %v174
  %v176 = vmul.f32 %v166, 1.442695
  %v177 = vpow.pop %v176
  %v178 = vmul.f32 %v167, 1.442695
  %v179 = vpow.pop %v178
  %v180 = vmul.f32 %v168, 1.442695
  %v181 = vpow.pop %v180
  %v182 = vmul.f32 %v169, 1.442695
  %v183 = vpow.pop %v182
  %v184 = vmul.f32 %v170, 1.442695
  %v185 = vpow.pop %v184
  %v186 = vmul.f32 %v171, 1.442695
  %v187 = vpow.pop %v186
  %v188 = vld [vmem:[%s2] sm:$0xff]
  %v189 = vld [vmem:[%s2 + $0x8] sm:$0xff]
  %v190 = vld [vmem:[%s2 + $0x10] sm:$0xff]
  %v191 = vld [vmem:[%s2 + $0x18] sm:$0xff]
  %v192 = vld [vmem:[%s2 + $0x20] sm:$0xff]
  %v193 = vld [vmem:[%s2 + $0x28] sm:$0xff]
  %v194 = vld [vmem:[%s2 + $0x30] sm:$0xff]
  %v195 = vld [vmem:[%s2 + $0x38] sm:$0xff]
  %v196 = vld [vmem:[%s2 + $0x40] sm:$0xff]
  %v197 = vld [vmem:[%s2 + $0x48] sm:$0xff]
  %v198 = vld [vmem:[%s2 + $0x50] sm:$0xff]
  %v199 = vld [vmem:[%s2 + $0x58] sm:$0xff]
  %v200 = vld [vmem:[%s2 + $0x60] sm:$0xff]
  %v201 = vld [vmem:[%s2 + $0x68] sm:$0xff]
  %v202 = vld [vmem:[%s2 + $0x70] sm:$0xff]
  %v203 = vld [vmem:[%s2 + $0x78] sm:$0xff]
  %v204 = vld [vmem:[%s3] sm:$0x1]
  %v206 = vlaneseq
  %v207 = vshrl.u32 %v206, 7
  %v208 = vsub.s32 0, %v207
  %v209 = vrot.slane %v204, %v208
  %211 = vmatprep.subr.mxu0 0.0
  %212 = vmatpush1.msra.mxu0 %v188
  %213 = vmatprep.subr.mxu0 0.0
  %214 = vmatpush1.msra.mxu0 %v189
  %215 = vmatprep.subr.mxu0 0.0
  %216 = vmatpush1.msra.mxu0 %v190
  %217 = vmatprep.subr.mxu0 0.0
  %218 = vmatpush1.msra.mxu0 %v191
  %219 = vmatprep.subr.mxu0 0.0
  %220 = vmatpush1.msra.mxu0 %v192
  %221 = vmatprep.subr.mxu0 0.0
  %222 = vmatpush1.msra.mxu0 %v193
  %223 = vmatprep.subr.mxu0 0.0
  %224 = vmatpush1.msra.mxu0 %v194
  %225 = vmatprep.subr.mxu0 0.0
  %226 = vmatpush1.msra.mxu0 %v195
  %227 = vmatprep.subr.mxu0 0.0
  %228 = vmatpush1.msra.mxu0 %v196
  %229 = vmatprep.subr.mxu0 0.0
  %230 = vmatpush1.msra.mxu0 %v197
  %231 = vmatprep.subr.mxu0 0.0
  %232 = vmatpush1.msra.mxu0 %v198
  %233 = vmatprep.subr.mxu0 0.0
  %234 = vmatpush1.msra.mxu0 %v199
  %235 = vmatprep.subr.mxu0 0.0
  %236 = vmatpush1.msra.mxu0 %v200
  %237 = vmatprep.subr.mxu0 0.0
  %238 = vmatpush1.msra.mxu0 %v201
  %239 = vmatprep.subr.mxu0 0.0
  %240 = vmatpush1.msra.mxu0 %v202
  %241 = vmatprep.subr.mxu0 0.0
  %242 = vmatpush1.msra.mxu0 %v203
  %243 = vmatprep.subr.mxu0 0.0
  %244 = vmatpush1.msra.mxu0 0.0
  %245 = vmatprep.subr.mxu0 0.0
  %246 = vmatpush1.msra.mxu0 0.0
  %247 = vmatprep.subr.mxu0 0.0
  %248 = vmatpush1.msra.mxu0 0.0
  %249 = vmatprep.subr.mxu0 0.0
  %250 = vmatpush1.msra.mxu0 0.0
  %251 = vmatprep.subr.mxu0 0.0
  %252 = vmatpush1.msra.mxu0 0.0
  %253 = vmatprep.subr.mxu0 0.0
  %254 = vmatpush1.msra.mxu0 0.0
  %255 = vmatprep.subr.mxu0 0.0
  %256 = vmatpush1.msra.mxu0 0.0
  %257 = vmatprep.subr.mxu0 0.0
  %258 = vmatpush1.msra.mxu0 0.0
  %259 = vmatprep.subr.mxu0 0.0
  %260 = vmatpush1.msra.mxu0 0.0
  %261 = vmatprep.subr.mxu0 0.0
  %262 = vmatpush1.msra.mxu0 0.0
  %263 = vmatprep.subr.mxu0 0.0
  %264 = vmatpush1.msra.mxu0 0.0
  %265 = vmatprep.subr.mxu0 0.0
  %266 = vmatpush1.msra.mxu0 0.0
  %267 = vmatprep.subr.mxu0 0.0
  %268 = vmatpush1.msra.mxu0 0.0
  %269 = vmatprep.subr.mxu0 0.0
  %270 = vmatpush1.msra.mxu0 0.0
  %271 = vmatprep.subr.mxu0 0.0
  %272 = vmatpush1.msra.mxu0 0.0
  %273 = vmatprep.subr.mxu0 0.0
  %274 = vmatpush1.msra.mxu0 0.0
  %275 = vmatprep.mubr.f32.mxu0 0.0
  %276 = vmatmul.mubr.f32.gmra.mrb[0].mxu0 %v173
  %v277 = vpop.f32.mrb[0].mxu0
  %v278 = vadd.f32 %v209, %v277
  %v279 = vpop.f32.mrb[0].mxu0
  %280 = vmatprep.mubr.f32.mxu0 0.0
  %281 = vmatmul.mubr.f32.gmra.mrb[0].mxu0 %v175
  %v282 = vpop.f32.mrb[0].mxu0
  %v283 = vadd.f32 %v209, %v282
  %v284 = vpop.f32.mrb[0].mxu0
  %285 = vmatprep.mubr.f32.mxu0 0.0
  %286 = vmatmul.mubr.f32.gmra.mrb[0].mxu0 %v177
  %v287 = vpop.f32.mrb[0].mxu0
  %v288 = vadd.f32 %v209, %v287
  %v289 = vpop.f32.mrb[0].mxu0
  %290 = vmatprep.mubr.f32.mxu0 0.0
  %291 = vmatmul.mubr.f32.gmra.mrb[0].mxu0 %v179
  %v292 = vpop.f32.mrb[0].mxu0
  %v293 = vadd.f32 %v209, %v292
  %v294 = vpop.f32.mrb[0].mxu0
  %295 = vmatprep.mubr.f32.mxu0 0.0
  %296 = vmatmul.mubr.f32.gmra.mrb[0].mxu0 %v181
  %v297 = vpop.f32.mrb[0].mxu0
  %v298 = vadd.f32 %v209, %v297
  %v299 = vpop.f32.mrb[0].mxu0
  %300 = vmatprep.mubr.f32.mxu0 0.0
  %301 = vmatmul.mubr.f32.gmra.mrb[0].mxu0 %v183
  %v302 = vpop.f32.mrb[0].mxu0
  %v303 = vadd.f32 %v209, %v302
  %v304 = vpop.f32.mrb[0].mxu0
  %305 = vmatprep.mubr.f32.mxu0 0.0
  %306 = vmatmul.mubr.f32.gmra.mrb[0].mxu0 %v185
  %v307 = vpop.f32.mrb[0].mxu0
  %v308 = vadd.f32 %v209, %v307
  %v309 = vpop.f32.mrb[0].mxu0
  %310 = vmatprep.mubr.f32.mxu0 0.0
  %311 = vmatmul.mubr.f32.gmra.mrb[0].mxu0 %v187
  %v312 = vpop.f32.mrb[0].mxu0
  %v313 = vadd.f32 %v209, %v312
  %v314 = vpop.f32.mrb[0].mxu0
  %315 = vdwg.mxu0
  %316 = vst [vmem:[%s4] sm:$0xff] %v278
  %317 = vst [vmem:[%s4 + $0x8] sm:$0xff] %v283
  %318 = vst [vmem:[%s4 + $0x10] sm:$0xff] %v288
  %319 = vst [vmem:[%s4 + $0x18] sm:$0xff] %v293
  %320 = vst [vmem:[%s4 + $0x20] sm:$0xff] %v298
  %321 = vst [vmem:[%s4 + $0x28] sm:$0xff] %v303
  %322 = vst [vmem:[%s4 + $0x30] sm:$0xff] %v308
  %323 = vst [vmem:[%s4 + $0x38] sm:$0xff] %v313
  // Predicated region
  $region18: #{_forward_padded.1} parent=0 // pred_check
    _
  $region19: #{_forward_padded.1} parent=0 // pred_check_branch
    %325 = sbr.rel (0) target = $region21
  $region20: #{_forward_padded.1} parent=0 // pred_region
    _
  $region21: #{_forward_padded.1} parent=0 // pred_fallthru
    _
  // Predicated region
  $region22: #{_forward_padded.1} parent=0 // pred_check
    _
  $region23: #{_forward_padded.1} parent=0 // pred_check_branch
    %327 = sbr.rel (0) target = $region25
  $region24: #{_forward_padded.1} parent=0 // pred_region
    _
  $region25: #{_forward_padded.1} parent=0 // pred_fallthru
    _

</llo_original>
